<compile_context>
chip_gen: v5e
topology: v5e:2x2
jax: 0.10.0
libtpu: 0.0.40
codegen_flags: <defaults>
</compile_context>

<pallas_src>
import jax
import jax.numpy as jnp
import numpy as np
from jax.experimental import pallas as pl
from jax.experimental.pallas import tpu as pltpu


def _make_tversky_kernel(C, tile_n, chunk_n, n_total, bps, has_mask,
                         needs_valid):
    """Kernel body specialised (at trace time) on sizes / flags."""
    n_chunks = tile_n // chunk_n
    n_lane_chunks = chunk_n // 128

    def _fold128(v):
        # (C, chunk_n) -> (C, 128): pairwise tree of static 128-aligned lane
        # chunks (pure VPU, no relayout, exposes ILP vs. a serial chain).
        parts = [v[:, j * 128:(j + 1) * 128] for j in range(n_lane_chunks)]
        while len(parts) > 1:
            nxt = [parts[i] + parts[i + 1] for i in range(0, len(parts) - 1, 2)]
            if len(parts) % 2:
                nxt.append(parts[-1])
            parts = nxt
        return parts[0]

    def kernel(*refs):
        if has_mask:
            logits_ref, target_ref, mask_ref, acc_ref = refs
        else:
            logits_ref, target_ref, acc_ref = refs
            mask_ref = None

        s_idx = pl.program_id(1)
        n_idx = pl.program_id(2)

        # Zero the merged lane-dense accumulator on the first N tile of each
        # (batch, split) pair.
        @pl.when(n_idx == 0)
        def _():
            acc_ref[...] = jnp.zeros_like(acc_ref)

        # Constants hoisted out of the chunk loop (broadcast_in_dim is not
        # CSE'd by JAX, so never rebuild these per chunk).
        ch_iota = jax.lax.broadcasted_iota(jnp.int32, (C, chunk_n), 0)
        if needs_valid:
            col_iota = jax.lax.broadcasted_iota(jnp.int32, (1, chunk_n), 1)
            # Element offset of this tile in the true (unpadded) N range; it
            # can exceed n_total for phantom blocks of the N split, in which
            # case every column is masked out below.
            rem0 = n_total - (s_idx * bps + n_idx) * tile_n

        zero = jnp.zeros((C, 128), jnp.float32)

        def chunk(ci, carry):
            tp_a, sp_a, st_a = carry
            off = ci * chunk_n
            if not isinstance(off, int):
                off = pl.multiple_of(off, 128)

            x = logits_ref[0, :, pl.ds(off, chunk_n)].astype(jnp.float32)
            t = target_ref[0, :, pl.ds(off, chunk_n)].astype(jnp.int32)

            if needs_valid:
                # Columns past the true spatial extent hold unspecified data
                # (no wrapper-side pad of logits) -> mask them out; x must be
                # zeroed BEFORE exp() to keep NaN/Inf out of the softmax.
                valid = col_iota < (rem0 - off)
                x = jnp.where(valid, x, 0.0)

            # Numerically stable softmax over the channel (sublane) axis.
            x_max = jnp.max(x, axis=0, keepdims=True)
            e = jnp.exp(x - x_max)
            den = jnp.sum(e, axis=0, keepdims=True)
            # EUP approximate reciprocal + 1 Newton step (~f32-exact for
            # den in [1, C], no vector divide).
            inv = pl.reciprocal(den, approx=True)
            inv = inv * (2.0 - den * inv)
            probs = e * inv

            # One-hot pattern; out-of-range targets give an all-zero one-hot
            # (matches jax.nn.one_hot; PyTorch scatter would error instead).
            eq = ch_iota == t

            if has_mask or needs_valid:
                if has_mask:
                    m = mask_ref[0, :, pl.ds(off, chunk_n)].astype(jnp.float32)
                    if needs_valid:
                        m = jnp.where(valid, m, 0.0)
                else:
                    m = valid.astype(jnp.float32)
                ohm = jnp.where(eq, m, 0.0)     # one_hot * mask
                pm = probs * m                  # probs   * mask
            else:
                ohm = eq.astype(jnp.float32)
                pm = probs

            return (tp_a + _fold128(pm * ohm),
                    sp_a + _fold128(pm),
                    st_a + _fold128(ohm))

        init = (zero, zero, zero)
        if n_chunks <= 8:
            carry = init
            for ci in range(n_chunks):
                carry = chunk(ci, carry)
        else:
            carry = jax.lax.fori_loop(0, n_chunks, chunk, init)

        tp_a, sp_a, st_a = carry
        # One merged accumulator: rows [0]=tp, [1]=sum(p*m), [2]=sum(oh*m).
        acc_ref[0, 0, 0] += tp_a
        acc_ref[0, 0, 1] += sp_a
        acc_ref[0, 0, 2] += st_a

    return kernel


def tversky_loss(logits, target, loss_mask=None, alpha=0.5, beta=0.5,
                 smooth=1e-5, tile_n=65536):
    """Forward pass of nnunetv2 TverskyLoss (softmax nonlinearity).

    logits: [B, C, *spatial]; target: [B, *spatial] or [B, 1, *spatial];
    loss_mask: optional [B, *spatial] or [B, 1, *spatial].
    """
    if target.ndim == logits.ndim and target.shape[1] == 1:
        target = target[:, 0]

    B, C = int(logits.shape[0]), int(logits.shape[1])
    N = 1
    for s in logits.shape[2:]:
        N *= int(s)

    # Stream everything in its native width; all upcasts happen in-kernel so
    # the wrapper never adds a full HBM read+write cast pass.
    logits_flat = logits.reshape(B, C, N)            # bf16 callers get 2B/px

    if (jnp.issubdtype(target.dtype, jnp.integer)
            and jnp.dtype(target.dtype).itemsize <= 4):
        target_flat = target.reshape(B, 1, N)        # int8/int16/int32 as-is
    else:
        target_flat = target.reshape(B, 1, N).astype(jnp.int32)

    has_mask = loss_mask is not None
    mask_flat = None
    if has_mask:
        if loss_mask.ndim == logits.ndim and loss_mask.shape[1] == 1:
            loss_mask = loss_mask[:, 0]
        mask_flat = loss_mask.reshape(B, 1, N)
        if mask_flat.dtype == jnp.bool_:
            mask_flat = mask_flat.astype(jnp.int8)   # 1-byte stream

    # ---- generation-aware VMEM budget / spatial tile selection --------------
    try:
        info = pltpu.get_tpu_info()
        vmem_cap = int(getattr(info, "vmem_capacity_bytes", 64 * 1024 * 1024))
    except Exception:
        vmem_cap = 64 * 1024 * 1024                  # v7x-safe fallback
    vmem_limit = int(min((vmem_cap * 3) // 4, 80 * 1024 * 1024))
    # Only the double-buffered input blocks scale with the tile (the compute
    # temporaries are O(chunk) thanks to sub-chunking); keep them in half the
    # limit, the rest is accumulators / compiler scratch / headroom.
    input_budget = vmem_limit // 2

    per_lane = (C * jnp.dtype(logits_flat.dtype).itemsize
                + jnp.dtype(target_flat.dtype).itemsize
                + (jnp.dtype(mask_flat.dtype).itemsize if has_mask else 0))
    cap = max(128, (input_budget // (2 * per_lane)) // 128 * 128)
    tn = max(128, (min(int(tile_n), cap) // 128) * 128)

    if N >= 128:
        # Never make the block longer than the array; a ragged LAST tile is
        # handled in-kernel, so no full-copy jnp.pad of logits is needed.
        tn = min(tn, (N // 128) * 128)
        n_arr = N
    else:
        # Tiny spatial extent: pad up to one 128-lane tile (negligible copy);
        # the in-kernel validity mask still uses the true N.
        tn = 128
        pad = 128 - N
        logits_flat = jnp.pad(logits_flat, ((0, 0), (0, 0), (0, pad)))
        target_flat = jnp.pad(target_flat, ((0, 0), (0, 0), (0, pad)))
        if has_mask:
            mask_flat = jnp.pad(mask_flat, ((0, 0), (0, 0), (0, pad)))
        n_arr = 128

    total_blocks = -(-n_arr // tn)
    S = 2 if total_blocks >= 2 else 1                # N-range split (v7x 2 TCs)

    # Prefer a nearby tile size (within 2x) that tiles N exactly and splits
    # evenly across S, so the per-chunk validity masking (extra VPU ops per
    # element — the slot that saturates first on v7x) is dropped at trace time.
    if (n_arr % tn != 0) or (total_blocks % S != 0):
        for cand in range(tn, max(tn // 2, 128) - 1, -128):
            if n_arr % cand == 0 and ((n_arr // cand) % S == 0):
                tn = cand
                break
    total_blocks = -(-n_arr // tn)
    bps = -(-total_blocks // S)                      # N blocks per split
    needs_valid = (N != n_arr) or (n_arr % tn != 0) or (bps * S != total_blocks)

    # Sub-chunk width: keep temporaries ~<= 4 vregs each so they stay
    # register-resident regardless of the tile size.
    ch = 128
    for cand in (512, 256):
        if tn % cand == 0 and C * cand <= 4096:
            ch = cand
            break

    kernel = _make_tversky_kernel(C=C, tile_n=tn, chunk_n=ch, n_total=N,
                                  bps=bps, has_mask=has_mask,
                                  needs_valid=needs_valid)

    def _nmap(b, s, n):
        # Phantom trailing blocks of the split are clamped to a real block;
        # their contributions are zeroed by the in-kernel validity mask.
        return (b, 0, jnp.minimum(s * bps + n, total_blocks - 1))

    data_spec = pl.BlockSpec((1, C, tn), _nmap)
    aux_spec = pl.BlockSpec((1, 1, tn), _nmap)
    in_specs = [data_spec, aux_spec] + ([aux_spec] if has_mask else [])
    # Merged lane-dense (3, C, 128) accumulator per (batch, split), resident
    # in VMEM across the N axis.
    out_spec = pl.BlockSpec((1, 1, 3, C, 128), lambda b, s, n: (b, s, 0, 0, 0))

    args = (logits_flat, target_flat) + ((mask_flat,) if has_mask else ())

    acc = pl.pallas_call(
        kernel,
        out_shape=jax.ShapeDtypeStruct((B, S, 3, C, 128), jnp.float32),
        grid_spec=pltpu.PrefetchScalarGridSpec(
            num_scalar_prefetch=0,
            grid=(B, S, bps),
            in_specs=in_specs,
            out_specs=out_spec,
        ),
        compiler_params=pltpu.CompilerParams(
            dimension_semantics=("parallel", "parallel", "arbitrary"),
            vmem_limit_bytes=vmem_limit),
    )(*args)

    # ---- tiny epilogue in plain JAX -----------------------------------------
    sums = jnp.sum(acc, axis=(1, 4))      # (B, 3, C): reduce split + lanes
    tp = sums[:, 0]                       # sum(probs*m * one_hot*m)
    sp = sums[:, 1]                       # sum(probs * m)
    st = sums[:, 2]                       # sum(one_hot * m)
    fp = sp - tp
    fn = st - tp
    tversky = (tp + smooth) / (tp + alpha * fp + beta * fn + smooth)
    return 1.0 - jnp.mean(tversky)


def _reference_loss(logits, target, loss_mask=None, alpha=0.5, beta=0.5,
                    smooth=1e-5):
    # Pure-JAX reference mirroring the PyTorch forward.
    probs = jax.nn.softmax(logits, axis=1)
    B, C = probs.shape[:2]
    pf = probs.reshape(B, C, -1)
    tf = target.reshape(B, -1)
    oh = jax.nn.one_hot(tf, C, axis=1, dtype=pf.dtype)
    if loss_mask is not None:
        m = loss_mask.reshape(B, 1, -1).astype(pf.dtype)
        oh = oh * m
        pf = pf * m
    tp = (pf * oh).sum(axis=2)
    fp = (pf * (1.0 - oh)).sum(axis=2)
    fn = ((1.0 - pf) * oh).sum(axis=2)
    tv = (tp + smooth) / (tp + alpha * fp + beta * fn + smooth)
    return 1.0 - tv.mean()


if __name__ == "__main__":
    # TverskyLoss has no learnable parameters; only alpha/beta/smooth scalars.
    key = jax.random.PRNGKey(0)
    k1, k2, k3, k4, k5, k6, k7, k8 = jax.random.split(key, 8)

    # 1) f32 logits / int32 targets, no mask, N a multiple of the tile.
    B, C, D, H, W = 2, 4, 4, 8, 8
    logits = jax.random.normal(k1, (B, C, D, H, W), dtype=jnp.float32)
    target = jax.random.randint(k2, (B, D, H, W), 0, C, dtype=jnp.int32)
    loss = jax.block_until_ready(tversky_loss(logits, target))
    ref = jax.block_until_ready(_reference_loss(logits, target))
    np.testing.assert_allclose(np.asarray(loss), np.asarray(ref),
                               rtol=1e-5, atol=1e-5)

    # 2) Ragged N (=315), int8 targets, bool mask, tiny tile: exercises the
    #    narrow input streams, the N split with a phantom trailing block and
    #    the in-kernel validity masking (no jnp.pad of logits).
    B2, C2, D2, H2, W2 = 1, 4, 5, 9, 7
    logits2 = jax.random.normal(k3, (B2, C2, D2, H2, W2), dtype=jnp.float32)
    target2 = jax.random.randint(k4, (B2, D2, H2, W2), 0, C2,
                                 dtype=jnp.int32).astype(jnp.int8)
    mask2 = jax.random.uniform(k5, (B2, 1, D2, H2, W2)) > 0.3        # bool
    loss2 = jax.block_until_ready(
        tversky_loss(logits2, target2, loss_mask=mask2, tile_n=128))
    ref2 = jax.block_until_ready(
        _reference_loss(logits2, target2, loss_mask=mask2.astype(jnp.float32)))
    np.testing.assert_allclose(np.asarray(loss2), np.asarray(ref2),
                               rtol=1e-5, atol=1e-5)

    # 3) Larger N (=12288) with an f32 mask: exercises the two-way N split,
    #    the divide-evenly tile search (8192 -> 6144, masking dropped) and the
    #    fori_loop sub-chunk path.
    B3, C3, D3, H3, W3 = 1, 4, 8, 32, 48
    logits3 = jax.random.normal(k6, (B3, C3, D3, H3, W3), dtype=jnp.float32)
    target3 = jax.random.randint(k7, (B3, D3, H3, W3), 0, C3, dtype=jnp.int32)
    mask3 = (jax.random.uniform(k8, (B3, 1, D3, H3, W3)) > 0.2).astype(
        jnp.float32)
    loss3 = jax.block_until_ready(
        tversky_loss(logits3, target3, loss_mask=mask3, tile_n=8192))
    ref3 = jax.block_until_ready(
        _reference_loss(logits3, target3, loss_mask=mask3))
    np.testing.assert_allclose(np.asarray(loss3), np.asarray(ref3),
                               rtol=1e-5, atol=1e-5)

    print("KERNEL_OK")
</pallas_src>

<mosaic_0001>
module attributes {stable_mosaic.version = 11 : i64} {
  func.func @kernel(%arg0: i32, %arg1: i32, %arg2: i32, %arg3: memref<1x4x256xf32, #tpu.memory_space<vmem>>, %arg4: memref<1x1x256xi32, #tpu.memory_space<vmem>>, %arg5: memref<1x1x3x4x128xf32, #tpu.memory_space<vmem>>) attributes {dimension_semantics = [#tpu.dimension_semantics<parallel>, #tpu.dimension_semantics<parallel>, #tpu.dimension_semantics<arbitrary>], iteration_bounds = array<i64: 2, 1, 1>, scalar_prefetch = 0 : i64, scratch_operands = 0 : i64, tpu.core_type = #tpu.core_type<tc>, window_params = [{transform_indices = @transform_0, window_bounds = array<i64: 1, 4, 256>}, {transform_indices = @transform_1, window_bounds = array<i64: 1, 1, 256>}, {transform_indices = @transform_2, window_bounds = array<i64: 1, 1, 3, 4, 128>}]} {
    %c0_i32 = arith.constant 0 : i32
    %0 = arith.cmpi eq, %arg2, %c0_i32 : i32
    %1 = arith.extui %0 : i1 to i32
    %c0_i32_0 = arith.constant 0 : i32
    %2 = arith.cmpi ne, %1, %c0_i32_0 : i32
    scf.if %2 {
      %cst_37 = arith.constant 0.000000e+00 : f32
      %58 = vector.broadcast %cst_37 : f32 to vector<1x1x3x4x128xf32>
      %c0_38 = arith.constant 0 : index
      %c0_39 = arith.constant 0 : index
      %c0_40 = arith.constant 0 : index
      %c0_41 = arith.constant 0 : index
      %c0_42 = arith.constant 0 : index
      %59 = vector.load %arg5[%c0_38, %c0_39, %c0_40, %c0_41, %c0_42] : memref<1x1x3x4x128xf32, #tpu.memory_space<vmem>>, vector<1x1x3x4x128xf32>
      tpu.vector_store %arg5[%c0_38, %c0_39, %c0_40, %c0_41, %c0_42], %58 {strides = array<i32>} : memref<1x1x3x4x128xf32, #tpu.memory_space<vmem>>, vector<1x1x3x4x128xf32>,
    } else {
    }
    %3 = tpu.iota {dimensions = array<i32: 0>} : vector<4x256xi32>
    %cst = arith.constant 0.000000e+00 : f32
    %4 = vector.broadcast %cst : f32 to vector<4x128xf32>
    %c0 = arith.constant 0 : index
    %c0_1 = arith.constant 0 : index
    %c0_2 = arith.constant 0 : index
    %5 = vector.load %arg3[%c0, %c0_1, %c0_2] : memref<1x4x256xf32, #tpu.memory_space<vmem>>, vector<1x4x256xf32>
    %6 = vector.shape_cast %5 : vector<1x4x256xf32> to vector<4x256xf32>
    %c0_3 = arith.constant 0 : index
    %c0_4 = arith.constant 0 : index
    %c0_5 = arith.constant 0 : index
    %7 = vector.load %arg4[%c0_3, %c0_4, %c0_5] : memref<1x1x256xi32, #tpu.memory_space<vmem>>, vector<1x1x256xi32>
    %8 = vector.shape_cast %7 : vector<1x1x256xi32> to vector<1x256xi32>
    %cst_6 = arith.constant dense<0xFF800000> : vector<256xf32>
    %9 = vector.multi_reduction <maximumf>, %6, %cst_6 [0] : vector<4x256xf32> to vector<256xf32>
    %10 = vector.shape_cast %9 : vector<256xf32> to vector<1x256xf32>
    %11 = vector.broadcast %10 : vector<1x256xf32> to vector<4x256xf32>
    %12 = arith.subf %6, %11 : vector<4x256xf32>
    %13 = math.exp %12 : vector<4x256xf32>
    %cst_7 = arith.constant dense<0.000000e+00> : vector<256xf32>
    %14 = vector.multi_reduction <add>, %13, %cst_7 [0] : vector<4x256xf32> to vector<256xf32>
    %15 = vector.shape_cast %14 : vector<256xf32> to vector<1x256xf32>
    %16 = tpu.reciprocal %15 {approx = true} : vector<1x256xf32> -> vector<1x256xf32>
    %17 = arith.mulf %15, %16 : vector<1x256xf32>
    %cst_8 = arith.constant 2.000000e+00 : f32
    %18 = vector.broadcast %cst_8 : f32 to vector<1x256xf32>
    %19 = arith.subf %18, %17 : vector<1x256xf32>
    %20 = arith.mulf %16, %19 : vector<1x256xf32>
    %21 = vector.broadcast %20 : vector<1x256xf32> to vector<4x256xf32>
    %22 = arith.mulf %13, %21 : vector<4x256xf32>
    %23 = vector.broadcast %8 : vector<1x256xi32> to vector<4x256xi32>
    %24 = arith.cmpi eq, %3, %23 : vector<4x256xi32>
    %25 = arith.extui %24 : vector<4x256xi1> to vector<4x256xi32>
    %26 = arith.sitofp %25 : vector<4x256xi32> to vector<4x256xf32>
    %27 = arith.mulf %22, %26 : vector<4x256xf32>
    %28 = vector.extract_strided_slice %27 {offsets = [0, 0], sizes = [4, 128], strides = [1, 1]} : vector<4x256xf32> to vector<4x128xf32>
    %29 = vector.extract_strided_slice %27 {offsets = [0, 128], sizes = [4, 128], strides = [1, 1]} : vector<4x256xf32> to vector<4x128xf32>
    %30 = arith.addf %28, %29 : vector<4x128xf32>
    %31 = arith.addf %4, %30 : vector<4x128xf32>
    %32 = vector.extract_strided_slice %22 {offsets = [0, 0], sizes = [4, 128], strides = [1, 1]} : vector<4x256xf32> to vector<4x128xf32>
    %33 = vector.extract_strided_slice %22 {offsets = [0, 128], sizes = [4, 128], strides = [1, 1]} : vector<4x256xf32> to vector<4x128xf32>
    %34 = arith.addf %32, %33 : vector<4x128xf32>
    %35 = arith.addf %4, %34 : vector<4x128xf32>
    %36 = vector.extract_strided_slice %26 {offsets = [0, 0], sizes = [4, 128], strides = [1, 1]} : vector<4x256xf32> to vector<4x128xf32>
    %37 = vector.extract_strided_slice %26 {offsets = [0, 128], sizes = [4, 128], strides = [1, 1]} : vector<4x256xf32> to vector<4x128xf32>
    %38 = arith.addf %36, %37 : vector<4x128xf32>
    %39 = arith.addf %4, %38 : vector<4x128xf32>
    %c0_9 = arith.constant 0 : index
    %c0_10 = arith.constant 0 : index
    %c0_11 = arith.constant 0 : index
    %c0_12 = arith.constant 0 : index
    %c0_13 = arith.constant 0 : index
    %40 = vector.load %arg5[%c0_9, %c0_10, %c0_11, %c0_12, %c0_13] : memref<1x1x3x4x128xf32, #tpu.memory_space<vmem>>, vector<1x1x1x4x128xf32>
    %41 = vector.shape_cast %40 : vector<1x1x1x4x128xf32> to vector<4x128xf32>
    %42 = arith.addf %41, %31 : vector<4x128xf32>
    %c0_14 = arith.constant 0 : index
    %c0_15 = arith.constant 0 : index
    %c0_16 = arith.constant 0 : index
    %c0_17 = arith.constant 0 : index
    %c0_18 = arith.constant 0 : index
    %43 = vector.load %arg5[%c0_14, %c0_15, %c0_16, %c0_17, %c0_18] : memref<1x1x3x4x128xf32, #tpu.memory_space<vmem>>, vector<1x1x1x4x128xf32>
    %44 = vector.shape_cast %43 : vector<1x1x1x4x128xf32> to vector<4x128xf32>
    %45 = vector.shape_cast %42 : vector<4x128xf32> to vector<1x1x1x4x128xf32>
    tpu.vector_store %arg5[%c0_14, %c0_15, %c0_16, %c0_17, %c0_18], %45 {strides = array<i32>} : memref<1x1x3x4x128xf32, #tpu.memory_space<vmem>>, vector<1x1x1x4x128xf32>,
    %c0_19 = arith.constant 0 : index
    %c0_20 = arith.constant 0 : index
    %c1 = arith.constant 1 : index
    %c0_21 = arith.constant 0 : index
    %c0_22 = arith.constant 0 : index
    %46 = vector.load %arg5[%c0_19, %c0_20, %c1, %c0_21, %c0_22] : memref<1x1x3x4x128xf32, #tpu.memory_space<vmem>>, vector<1x1x1x4x128xf32>
    %47 = vector.shape_cast %46 : vector<1x1x1x4x128xf32> to vector<4x128xf32>
    %48 = arith.addf %47, %35 : vector<4x128xf32>
    %c0_23 = arith.constant 0 : index
    %c0_24 = arith.constant 0 : index
    %c1_25 = arith.constant 1 : index
    %c0_26 = arith.constant 0 : index
    %c0_27 = arith.constant 0 : index
    %49 = vector.load %arg5[%c0_23, %c0_24, %c1_25, %c0_26, %c0_27] : memref<1x1x3x4x128xf32, #tpu.memory_space<vmem>>, vector<1x1x1x4x128xf32>
    %50 = vector.shape_cast %49 : vector<1x1x1x4x128xf32> to vector<4x128xf32>
    %51 = vector.shape_cast %48 : vector<4x128xf32> to vector<1x1x1x4x128xf32>
    tpu.vector_store %arg5[%c0_23, %c0_24, %c1_25, %c0_26, %c0_27], %51 {strides = array<i32>} : memref<1x1x3x4x128xf32, #tpu.memory_space<vmem>>, vector<1x1x1x4x128xf32>,
    %c0_28 = arith.constant 0 : index
    %c0_29 = arith.constant 0 : index
    %c2 = arith.constant 2 : index
    %c0_30 = arith.constant 0 : index
    %c0_31 = arith.constant 0 : index
    %52 = vector.load %arg5[%c0_28, %c0_29, %c2, %c0_30, %c0_31] : memref<1x1x3x4x128xf32, #tpu.memory_space<vmem>>, vector<1x1x1x4x128xf32>
    %53 = vector.shape_cast %52 : vector<1x1x1x4x128xf32> to vector<4x128xf32>
    %54 = arith.addf %53, %39 : vector<4x128xf32>
    %c0_32 = arith.constant 0 : index
    %c0_33 = arith.constant 0 : index
    %c2_34 = arith.constant 2 : index
    %c0_35 = arith.constant 0 : index
    %c0_36 = arith.constant 0 : index
    %55 = vector.load %arg5[%c0_32, %c0_33, %c2_34, %c0_35, %c0_36] : memref<1x1x3x4x128xf32, #tpu.memory_space<vmem>>, vector<1x1x1x4x128xf32>
    %56 = vector.shape_cast %55 : vector<1x1x1x4x128xf32> to vector<4x128xf32>
    %57 = vector.shape_cast %54 : vector<4x128xf32> to vector<1x1x1x4x128xf32>
    tpu.vector_store %arg5[%c0_32, %c0_33, %c2_34, %c0_35, %c0_36], %57 {strides = array<i32>} : memref<1x1x3x4x128xf32, #tpu.memory_space<vmem>>, vector<1x1x1x4x128xf32>,
    return
  }
  func.func @transform_0(%arg0: i32, %arg1: i32, %arg2: i32) -> (i32, i32, i32) {
    %c1_i32 = arith.constant 1 : i32
    %0 = arith.muli %arg1, %c1_i32 : i32
    %1 = arith.addi %0, %arg2 : i32
    %c0_i32 = arith.constant 0 : i32
    %2 = arith.minsi %1, %c0_i32 : i32
    %c0_i32_0 = arith.constant 0 : i32
    %c0_i32_1 = arith.constant 0 : i32
    return %arg0, %c0_i32_0, %2 : i32, i32, i32
  }
  func.func @transform_1(%arg0: i32, %arg1: i32, %arg2: i32) -> (i32, i32, i32) {
    %c1_i32 = arith.constant 1 : i32
    %0 = arith.muli %arg1, %c1_i32 : i32
    %1 = arith.addi %0, %arg2 : i32
    %c0_i32 = arith.constant 0 : i32
    %2 = arith.minsi %1, %c0_i32 : i32
    %c0_i32_0 = arith.constant 0 : i32
    %c0_i32_1 = arith.constant 0 : i32
    return %arg0, %c0_i32_0, %2 : i32, i32, i32
  }
  func.func @transform_2(%arg0: i32, %arg1: i32, %arg2: i32) -> (i32, i32, i32, i32, i32) {
    %c0_i32 = arith.constant 0 : i32
    %c0_i32_0 = arith.constant 0 : i32
    %c0_i32_1 = arith.constant 0 : i32
    %c0_i32_2 = arith.constant 0 : i32
    return %arg0, %arg1, %c0_i32, %c0_i32_0, %c0_i32_1 : i32, i32, i32, i32, i32
  }
}

</mosaic_0001>

<llo_original>
// kernel: tpu_custom_call.1
$region0: #{tpu_custom_call.1}
  #allocation0 [shape = 'u32[]', space=smem, size = 0x4, offset = 0x4, fixed_abs, tag = 'smem constant byte address 0x4 - core index']
  #allocation1 [shape = 'u32[72,128]{1,0:T(1,128)}', space=vmem, size = 0x9000, scoped, tag = 'internal scratch']
  %s0 = inlined_call_operand.hbm [shape: f32[2,4,256], index: 0, kind: input, shape index: {}]
  %s1 = inlined_call_operand.hbm [shape: s32[2,1,256], index: 1, kind: input, shape index: {}]
  %s2 = inlined_call_operand.hbm [shape: f32[2,1,3,4,128], index: 2, kind: output, shape index: {}]
  %s3 = sld [smem:[#allocation0]]
  $region53: #{tpu_custom_call.1} parent=0
    _
  %s5 = ssub.s32 1, %s3
  %s6 = scalar_select 0, %s5, %s3
  $region1: #{tpu_custom_call.1} parent=0
    #allocation2 [shape = 'u8[8192]{0}', space=vmem, size = 0x2000, scoped, tag = 'input window, operand 0']
    #allocation3 [shape = 's32[2]{0}', space=sflag, size = 0x8, scoped, tag = 'scoped memory for tpu_custom_call.1']
    #allocation4 [shape = 's32[2]{0}', space=sflag, size = 0x8, scoped, tag = 'scoped memory for tpu_custom_call.1']
    #allocation5 [shape = 'u8[2048]{0}', space=vmem, size = 0x800, scoped, tag = 'input window, operand 1']
    #allocation6 [shape = 's32[2]{0}', space=sflag, size = 0x8, scoped, tag = 'scoped memory for tpu_custom_call.1']
    #allocation7 [shape = 'u8[12288]{0}', space=vmem, size = 0x3000, scoped, tag = 'output window, operand 0']
    %7 = vsyncpa [#allocation3], 0
    %s8 = scalar_lea.sflag [#allocation3], 1
    %9 = vsyncpa %s8, 0
    %10 = vsyncpa [#allocation6], 0
    %s11 = scalar_lea.sflag [#allocation6], 1
    %12 = vsyncpa %s11, 0
    %13 = vsyncpa [#allocation4], 0
    %s14 = scalar_lea.sflag [#allocation4], 1
    %15 = vsyncpa %s14, 0
    loop: start=0, step=1, limit=4
    $region2: #{tpu_custom_call.1} parent=1 // loop_pre_header
      _
    $region3: #{tpu_custom_call.1} parent=1 // loop_header
      %s17 = sphi 0, %s21
      %p18 = scmp.ge.s32.totalorder %s17, 4
      %s24 = sphi 0, %s43
      %s25 = sphi 0, %s39
      %s26 = sphi 0, %s35
      %s27 = sphi 0, %s24
      %s28 = sphi 0, %s25
      %s29 = sphi 0, %s26
      %s30 = sphi 0, %s27
      %s31 = sphi 0, %s28
      %s32 = sphi 0, %s29
      %s54 = sphi 0, %s56
      %s57 = sphi 0, %s54
      %s58 = sphi 0, %s57
      %s74 = sphi 0, %s58
      %s88 = sphi 0, %s90
      %s91 = sphi 0, %s88
      %s92 = sphi 0, %s91
      %s108 = sphi 0, %s92
      %s116 = sphi 0, %s118
      %s119 = sphi 0, %s116
      %s120 = sphi 0, %s119
      %s136 = sphi 0, %s120
    $region4: #{tpu_custom_call.1} parent=1 // loop_header_branch
      %20 = sbr.rel (%p18) target = $region8
    $region5: #{tpu_custom_call.1} parent=1 // loop_body
      %s22 = ssub.s32 %s17, 1
      %s23 = ssub.s32 %s17, 2
      %s33 = sadd.s32 1, %s26
      %p34 = scmp.ge.s32.totalorder %s33, 1
      %s35 = scalar_select %p34, 0, %s33
      %s36 = sadd.s32 1, %s25
      %s37 = scalar_select %p34, %s36, %s25
      %p38 = scmp.ge.s32.totalorder %s37, 1
      %s39 = scalar_select %p38, 0, %s37
      %s40 = sadd.s32 1, %s24
      %s41 = scalar_select %p38, %s40, %s24
      %p42 = scmp.ge.s32.totalorder %s41, 2
      %s43 = scalar_select %p42, 0, %s41
      %s44 = sadd.s32 %s25, %s26
      %p45 = scmp.lt.s32.totalorder %s44, 0
      %s46 = scalar_select %p45, %s44, 0
      %s47 = sadd.s32 %s39, %s35
      %p48 = scmp.lt.s32.totalorder %s47, 0
      %s49 = scalar_select %p48, %s47, 0
      %s50 = ssub.s32 %s24, %s43
      %s51 = ssub.s32 %s46, %s49
      %s52 = sor.u32 %s50, %s51
      %p53 = scmp.eq.s32.totalorder %s52, 0
      %s55 = sadd.s32 %s54, 1
      %s56 = scalar_select %p53, %s54, %s55
      %p59 = pneg %p53
      %p60 = scmp.eq.s32.totalorder %s17, 1
      %p61 = por %p59, %p60
      %p62 = scmp.ne.s32.totalorder %s54, %s57
      %p63 = scmp.eq.s32.totalorder %s17, 0
      %p64 = por %p62, %p63
      %p65 = scmp.ne.s32.totalorder %s54, %s57
      %p66 = scmp.eq.s32.totalorder %s22, 1
      %p67 = por %p65, %p66
      %p68 = scmp.ne.s32.totalorder %s57, %s58
      %p69 = scmp.eq.s32.totalorder %s22, 0
      %p70 = por %p68, %p69
      %p71 = scmp.ne.s32.totalorder %s57, %s58
      %p72 = scmp.eq.s32.totalorder %s23, 1
      %p73 = por %p71, %p72
      %p75 = scmp.ne.s32.totalorder %s58, %s74
      %p76 = scmp.eq.s32.totalorder %s23, 0
      %p77 = por %p75, %p76
      %s78 = sadd.s32 %s25, %s26
      %p79 = scmp.lt.s32.totalorder %s78, 0
      %s80 = scalar_select %p79, %s78, 0
      %s81 = sadd.s32 %s39, %s35
      %p82 = scmp.lt.s32.totalorder %s81, 0
      %s83 = scalar_select %p82, %s81, 0
      %s84 = ssub.s32 %s24, %s43
      %s85 = ssub.s32 %s80, %s83
      %s86 = sor.u32 %s84, %s85
      %p87 = scmp.eq.s32.totalorder %s86, 0
      %s89 = sadd.s32 %s88, 1
      %s90 = scalar_select %p87, %s88, %s89
      %p93 = pneg %p87
      %p94 = scmp.eq.s32.totalorder %s17, 1
      %p95 = por %p93, %p94
      %p96 = scmp.ne.s32.totalorder %s88, %s91
      %p97 = scmp.eq.s32.totalorder %s17, 0
      %p98 = por %p96, %p97
      %p99 = scmp.ne.s32.totalorder %s88, %s91
      %p100 = scmp.eq.s32.totalorder %s22, 1
      %p101 = por %p99, %p100
      %p102 = scmp.ne.s32.totalorder %s91, %s92
      %p103 = scmp.eq.s32.totalorder %s22, 0
      %p104 = por %p102, %p103
      %p105 = scmp.ne.s32.totalorder %s91, %s92
      %p106 = scmp.eq.s32.totalorder %s23, 1
      %p107 = por %p105, %p106
      %p109 = scmp.ne.s32.totalorder %s92, %s108
      %p110 = scmp.eq.s32.totalorder %s23, 0
      %p111 = por %p109, %p110
      %s112 = ssub.s32 %s24, %s43
      %s113 = ssub.s32 %s25, %s39
      %s114 = sor.u32 %s112, %s113
      %p115 = scmp.eq.s32.totalorder %s114, 0
      %s117 = sadd.s32 %s116, 1
      %s118 = scalar_select %p115, %s116, %s117
      %p121 = pneg %p115
      %p122 = scmp.eq.s32.totalorder %s17, 1
      %p123 = por %p121, %p122
      %p124 = scmp.ne.s32.totalorder %s116, %s119
      %p125 = scmp.eq.s32.totalorder %s17, 0
      %p126 = por %p124, %p125
      %p127 = scmp.ne.s32.totalorder %s116, %s119
      %p128 = scmp.eq.s32.totalorder %s22, 1
      %p129 = por %p127, %p128
      %p130 = scmp.ne.s32.totalorder %s119, %s120
      %p131 = scmp.eq.s32.totalorder %s22, 0
      %p132 = por %p130, %p131
      %p133 = scmp.ne.s32.totalorder %s119, %s120
      %p134 = scmp.eq.s32.totalorder %s23, 1
      %p135 = por %p133, %p134
      %p137 = scmp.ne.s32.totalorder %s120, %s136
      %p138 = scmp.eq.s32.totalorder %s23, 0
      %p139 = por %p137, %p138
      %p140 = scmp.le.s32.totalorder 1, %s17
      %p141 = scmp.lt.s32.totalorder %s17, 3
      %p142 = pnand %p140, %p141
      %p143 = pneg %p142
      // Predicated region
      $region9: #{tpu_custom_call.1} parent=5 // pred_check
        _
      $region10: #{tpu_custom_call.1} parent=5 // pred_check_branch
        %145 = sbr.rel (%p142) target = $region12
      $region11: #{tpu_custom_call.1} parent=5 // pred_region
        %s146 = ssub.s32 %s17, 1
      $region12: #{tpu_custom_call.1} parent=5 // pred_fallthru
        _
      %p147 = scmp.lt.s32.totalorder %s17, 2
      // Predicated region
      $region13: #{tpu_custom_call.1} parent=5 // pred_check
        %p148 = pneg %p147
      $region14: #{tpu_custom_call.1} parent=5 // pred_check_branch
        %150 = sbr.rel (%p148) target = $region16
      $region15: #{tpu_custom_call.1} parent=5 // pred_region
        // Predicated region
        $region17: #{tpu_custom_call.1} parent=15 // pred_check
          %p151 = pneg %p64
        $region18: #{tpu_custom_call.1} parent=15 // pred_check_branch
          %153 = sbr.rel (%p151) target = $region20
        $region19: #{tpu_custom_call.1} parent=15 // pred_region
          %s154 = sand.u32 %s54, 1
          %s155 = scalar_lea.sflag [#allocation3], %s154
          %s156 = sand.u32 %s54, 1
          %s157 = smul.addr %s156, 8
          %s158 = scalar_lea.vmem [#allocation2], %s157
          %s159 = sadd.s32 %s25, %s26
          %p160 = scmp.lt.s32.totalorder %s159, 0
          %s161 = scalar_select %p160, %s159, 0
          %s162 = smul.u32 2, %s161
          %164 = vsyncadd %s155, 0
          %s165 = smul.addr %s24, 2
          %s166 = sadd.s32 %s162, %s165
          %s167 = smul.addr %s166, 4
          %s168 = scalar_lea.hbm %s0, %s167
          %s170 = sshll.u32 %s168, 4
          %s171 = int_to_ptr.hbm [resolvable:$true] %s170
          %s172 = sshll.u32 %s158, 4
          %s173 = int_to_ptr.vmem [resolvable:$true] %s172
          %175 = dma.hbm_to_vmem [thread:$0]  %s171, 128, %s173, %s155
        $region20: #{tpu_custom_call.1} parent=15 // pred_fallthru
          _
        // Predicated region
        $region21: #{tpu_custom_call.1} parent=15 // pred_check
          %p176 = pneg %p98
        $region22: #{tpu_custom_call.1} parent=15 // pred_check_branch
          %178 = sbr.rel (%p176) target = $region24
        $region23: #{tpu_custom_call.1} parent=15 // pred_region
          %s179 = sand.u32 %s88, 1
          %s180 = scalar_lea.sflag [#allocation6], %s179
          %s181 = sand.u32 %s88, 1
          %s182 = smul.addr %s181, 2
          %s183 = scalar_lea.vmem [#allocation5], %s182
          %s184 = sadd.s32 %s25, %s26
          %p185 = scmp.lt.s32.totalorder %s184, 0
          %s186 = scalar_select %p185, %s184, 0
          %s187 = smul.u32 2, %s186
          %189 = vsyncadd %s180, 0
          %s190 = smul.addr %s24, 2
          %s191 = sadd.s32 %s187, %s190
          %s192 = scalar_lea.hbm %s1, %s191
          %s194 = sshll.u32 %s192, 4
          %s195 = int_to_ptr.hbm [resolvable:$true] %s194
          %s196 = sshll.u32 %s183, 4
          %s197 = int_to_ptr.vmem [resolvable:$true] %s196
          %199 = dma.hbm_to_vmem [thread:$0]  %s195, 32, %s197, %s180
        $region24: #{tpu_custom_call.1} parent=15 // pred_fallthru
          _
      $region16: #{tpu_custom_call.1} parent=5 // pred_fallthru
        _
      %p200 = scmp.le.s32.totalorder 1, %s17
      %p201 = scmp.lt.s32.totalorder %s17, 3
      %p202 = pnand %p200, %p201
      %p203 = pneg %p202
      // Predicated region
      $region25: #{tpu_custom_call.1} parent=5 // pred_check
        _
      $region26: #{tpu_custom_call.1} parent=5 // pred_check_branch
        %205 = sbr.rel (%p202) target = $region28
      $region27: #{tpu_custom_call.1} parent=5 // pred_region
        %s206 = ssub.s32 %s17, 1
        %s207 = sand.u32 %s57, 1
        %s208 = scalar_lea.sflag [#allocation3], %s207
        %s209 = sand.u32 %s57, 1
        %s210 = smul.addr %s209, 8
        %s211 = scalar_lea.vmem [#allocation2], %s210
        // Predicated region
        $region29: #{tpu_custom_call.1} parent=27 // pred_check
          %p212 = pneg %p70
        $region30: #{tpu_custom_call.1} parent=27 // pred_check_branch
          %214 = sbr.rel (%p212) target = $region32
        $region31: #{tpu_custom_call.1} parent=27 // pred_region
          %216 = dma.done %s208, 128
        $region32: #{tpu_custom_call.1} parent=27 // pred_fallthru
          _
        %s217 = sand.u32 %s91, 1
        %s218 = scalar_lea.sflag [#allocation6], %s217
        %s219 = sand.u32 %s91, 1
        %s220 = smul.addr %s219, 2
        %s221 = scalar_lea.vmem [#allocation5], %s220
        // Predicated region
        $region33: #{tpu_custom_call.1} parent=27 // pred_check
          %p222 = pneg %p104
        $region34: #{tpu_custom_call.1} parent=27 // pred_check_branch
          %224 = sbr.rel (%p222) target = $region36
        $region35: #{tpu_custom_call.1} parent=27 // pred_region
          %226 = dma.done %s218, 32
        $region36: #{tpu_custom_call.1} parent=27 // pred_fallthru
          _
        %s227 = sand.u32 %s57, 1
        %s228 = scalar_lea.sflag [#allocation3], %s227
        %s229 = sand.u32 %s57, 1
        %s230 = smul.addr %s229, 8
        %s231 = scalar_lea.vmem [#allocation2], %s230
        %p232 = pneg %p70
        %p233 = pneg %p67
        %s234 = sand.u32 %s91, 1
        %s235 = scalar_lea.sflag [#allocation6], %s234
        %s236 = sand.u32 %s91, 1
        %s237 = smul.addr %s236, 2
        %s238 = scalar_lea.vmem [#allocation5], %s237
        %p239 = pneg %p104
        %p240 = pneg %p101
        %p241 = pneg %p132
        %p242 = pneg %p129
        %s243 = sand.u32 %s119, 1
        %s244 = scalar_lea.sflag [#allocation4], %s243
        %s245 = sand.u32 %s119, 1
        %s246 = smul.addr %s245, 12
        %s247 = scalar_lea.vmem [#allocation7], %s246
        %s248 = sadd.s32 %s28, %s29
        %p249 = scmp.lt.s32.totalorder %s248, 0
        %s250 = scalar_select %p249, %s248, 0
        %s251 = smul.u32 2, %s250
        %s252 = sadd.s32 %s28, %s29
        %p253 = scmp.lt.s32.totalorder %s252, 0
        %s254 = scalar_select %p253, %s252, 0
        %s255 = smul.u32 2, %s254
        %p256 = scmp.eq.s32.totalorder %s29, 0
        // Predicated region
        $region37: #{tpu_custom_call.1} parent=27 // pred_check
          %p257 = pneg %p256
        $region38: #{tpu_custom_call.1} parent=27 // pred_check_branch
          %259 = sbr.rel (%p257) target = $region40
        $region39: #{tpu_custom_call.1} parent=27 // pred_region
          %260 = vst [vmem:[%s247] sm:$0xf] 0.0
          %261 = vst [vmem:[%s247 + $0x4] sm:$0xf] 0.0
          %262 = vst [vmem:[%s247 + $0x8] sm:$0xf] 0.0
        $region40: #{tpu_custom_call.1} parent=27 // pred_fallthru
          _
        %v263 = vlaneseq
        %v264 = vshrl.u32 %v263, 7
        %v265 = vld [vmem:[%s211] sm:$0xff]
        %v266 = vld [vmem:[%s221] sm:$0x3]
        %268 = vst [vmem:[#allocation1] ss:$2 sm:$0xff] %v265
        %v269 = vld.sshfl [vmem:[#allocation1] sm:$0xff pattern:$0x75316420]
        %v270 = vld.sshfl [vmem:[#allocation1 + $0x8] sm:$0xff pattern:$0x75316420]
        %vm273 = vcmask 1043456
        %v274 = vsel %vm273, %v269, -inf
        %v275 = vrot.slane %v274, 4
        %v276 = vmax.f32 %v274, %v275
        %v277 = vrot.slane %v276, 2
        %v278 = vmax.f32 %v276, %v277
        %v279 = vrot.slane %v278, 1
        %v280 = vmax.f32 %v278, %v279
        %v281 = vsel %vm273, %v270, -inf
        %v282 = vrot.slane %v281, 4
        %v283 = vmax.f32 %v281, %v282
        %v284 = vrot.slane %v283, 2
        %v285 = vmax.f32 %v283, %v284
        %v286 = vrot.slane %v285, 1
        %v287 = vmax.f32 %v285, %v286
        %v290 = vrot.slane %v287, 4
        %v291 = vsel %vm273, %v280, %v290
        %v293 = vsub.f32 %v265, %v291
        %v294 = vmul.f32 %v293, 1.442695
        %v295 = vpow.pop %v294
        %297 = vst [vmem:[#allocation1] ss:$2 sm:$0xff] %v295
        %v298 = vld.sshfl [vmem:[#allocation1] sm:$0xff pattern:$0x75316420]
        %v299 = vld.sshfl [vmem:[#allocation1 + $0x8] sm:$0xff pattern:$0x75316420]
        %v302 = vsel %vm273, %v298, 0.0
        %v303 = vrot.slane %v302, 4
        %v304 = vadd.f32 %v302, %v303
        %v305 = vrot.slane %v304, 2
        %v306 = vadd.f32 %v304, %v305
        %v307 = vrot.slane %v306, 1
        %v308 = vadd.f32 %v306, %v307
        %v309 = vsel %vm273, %v299, 0.0
        %v310 = vrot.slane %v309, 4
        %v311 = vadd.f32 %v309, %v310
        %v312 = vrot.slane %v311, 2
        %v313 = vadd.f32 %v311, %v312
        %v314 = vrot.slane %v313, 1
        %v315 = vadd.f32 %v313, %v314
        %v316 = vrcp.pop %v308
        %v317 = vrcp.pop %v315
        %v318 = vmul.f32 %v308, %v316
        %v319 = vmul.f32 %v315, %v317
        %v320 = vsub.f32 2.0, %v318
        %v321 = vsub.f32 2.0, %v319
        %v322 = vmul.f32 %v316, %v320
        %v323 = vmul.f32 %v317, %v321
        %v326 = vrot.slane %v323, 4
        %v327 = vsel %vm273, %v322, %v326
        %v329 = vmul.f32 %v295, %v327
        %v330 = vperm.slane %v266, 0
        %v331 = vperm.slane %v266, 1
        %vm332 = vcmp.eq.s32.totalorder %v264, %v330
        %vm333 = vcmp.eq.s32.totalorder %v264, %v331
        %v334 = vsel %vm332, 1, 0
        %v335 = vsel %vm333, 1, 0
        %v336 = vcvt.s32.f32 %v334
        %v337 = vcvt.s32.f32 %v335
        %v340 = vrot.slane %v337, 4
        %v341 = vsel %vm273, %v336, %v340
        %v343 = vmul.f32 %v329, %v341
        %v345 = vrot.slane %v343, 4
        %v347 = vadd.f32 %v343, %v345
        %v348 = vadd.f32 %v347, 0.0
        %v350 = vrot.slane %v329, 4
        %v352 = vadd.f32 %v329, %v350
        %v353 = vadd.f32 %v352, 0.0
        %v354 = vadd.f32 %v336, %v337
        %v355 = vadd.f32 %v354, 0.0
        %v356 = vld [vmem:[%s247] sm:$0xf]
        %v357 = vadd.f32 %v356, %v348
        %358 = vst [vmem:[%s247] sm:$0xf] %v357
        %s359 = scalar_lea.vmem %s247, 4 [#allocation7]
        %v360 = vld [vmem:[%s359] sm:$0xf]
        %v361 = vadd.f32 %v360, %v353
        %362 = vst [vmem:[%s359] sm:$0xf] %v361
        %s363 = scalar_lea.vmem %s247, 8 [#allocation7]
        %v364 = vld [vmem:[%s363] sm:$0xf]
        %v365 = vadd.f32 %v364, %v355
        %366 = vst [vmem:[%s363] sm:$0xf] %v365
        %s367 = sand.u32 %s119, 1
        %s368 = scalar_lea.sflag [#allocation4], %s367
        %s369 = sand.u32 %s119, 1
        %s370 = smul.addr %s369, 12
        %s371 = scalar_lea.vmem [#allocation7], %s370
        // Predicated region
        $region41: #{tpu_custom_call.1} parent=27 // pred_check
          %p372 = pneg %p129
        $region42: #{tpu_custom_call.1} parent=27 // pred_check_branch
          %374 = sbr.rel (%p372) target = $region44
        $region43: #{tpu_custom_call.1} parent=27 // pred_region
          %376 = vsyncadd %s368, 0
          %s377 = smul.addr %s28, 3
          %s378 = smul.addr %s27, 3
          %s379 = sadd.s32 %s377, %s378
          %s380 = smul.addr %s379, 4
          %s381 = scalar_lea.hbm %s2, %s380
          %s382 = sshll.u32 %s371, 4
          %s383 = int_to_ptr.vmem [resolvable:$true] %s382
          %s384 = sshll.u32 %s381, 4
          %s385 = int_to_ptr.hbm [resolvable:$true] %s384
          %390 = dma.vmem_to_hbm [thread:$0]  %s383, 192, %s385, %s368, 64, 64, 4
        $region44: #{tpu_custom_call.1} parent=27 // pred_fallthru
          _
      $region28: #{tpu_custom_call.1} parent=5 // pred_fallthru
        _
      %p391 = scmp.le.s32.totalorder 2, %s17
      // Predicated region
      $region45: #{tpu_custom_call.1} parent=5 // pred_check
        %p392 = pneg %p391
      $region46: #{tpu_custom_call.1} parent=5 // pred_check_branch
        %394 = sbr.rel (%p392) target = $region48
      $region47: #{tpu_custom_call.1} parent=5 // pred_region
        %s395 = ssub.s32 %s17, 2
        // Predicated region
        $region49: #{tpu_custom_call.1} parent=47 // pred_check
          %p396 = pneg %p135
        $region50: #{tpu_custom_call.1} parent=47 // pred_check_branch
          %398 = sbr.rel (%p396) target = $region52
        $region51: #{tpu_custom_call.1} parent=47 // pred_region
          %s399 = sand.u32 %s120, 1
          %s400 = scalar_lea.sflag [#allocation4], %s399
          %s401 = sand.u32 %s120, 1
          %s402 = smul.addr %s401, 12
          %s403 = scalar_lea.vmem [#allocation7], %s402
          %405 = dma.done %s400, 192
        $region52: #{tpu_custom_call.1} parent=47 // pred_fallthru
          _
      $region48: #{tpu_custom_call.1} parent=5 // pred_fallthru
        _
    $region6: #{tpu_custom_call.1} parent=1 // loop_footer
      %s21 = sadd.s32 1, %s17
    $region7: #{tpu_custom_call.1} parent=1 // loop_footer_branch
      %16 = sbr.rel target = $region3
    $region8: #{tpu_custom_call.1} parent=1 // loop_exit
      _
    %406 = vsyncpa [#allocation3], 1
    %s407 = scalar_lea.sflag [#allocation3], 1
    %408 = vsyncpa %s407, 1
    %409 = vsyncpa [#allocation6], 1
    %s410 = scalar_lea.sflag [#allocation6], 1
    %411 = vsyncpa %s410, 1
    %412 = vsyncpa [#allocation4], 1
    %s413 = scalar_lea.sflag [#allocation4], 1
    %414 = vsyncpa %s413, 1

</llo_original>
